<compile_context>
chip_gen: v7x
topology: tpu7x:2x2x1
jax: 0.10.0
libtpu: 0.0.40
codegen_flags: <defaults>
</compile_context>

<pallas_src>
import functools
import math

import jax
import jax.numpy as jnp
from jax import lax
from jax.experimental import pallas as pl
from jax.experimental.pallas import tpu as pltpu

# Finite "-inf": exp(NEG - m) underflows to exactly 0 in f32 and NEG + NEG
# does not overflow, so masked positions never poison the online softmax.
NEG = -1.0e9


# ---------------------------------------------------------------------------
# Tile helper: largest multiple of `mult` <= cap that divides `dim`, else the
# full dim (always satisfies the (8, 128) block rules: divisible or full-dim).
# ---------------------------------------------------------------------------
def _pick_tile(dim, cap, mult):
    if dim <= cap:
        return dim
    for t in range(cap - cap % mult, mult - 1, -mult):
        if dim % t == 0:
            return t
    return dim


def _compiler_params(dims):
    kwargs = dict(dimension_semantics=dims)
    try:
        # Generation-aware scoped-VMEM budget (v5e/v6e -> 64 MiB, v7x -> 32 MiB).
        cap = pltpu.get_tpu_info().vmem_capacity_bytes
        kwargs["vmem_limit_bytes"] = int(min(cap // 2, 64 * 1024 * 1024))
    except Exception:
        pass
    return pltpu.CompilerParams(**kwargs)


# ---------------------------------------------------------------------------
# Tiled linear: y = x @ wt + b  (wt pre-transposed [D_in, D_out], bf16)
# ---------------------------------------------------------------------------
def _linear_kernel(x_ref, wt_ref, b_ref, o_ref, acc_ref):
    k = pl.program_id(2)

    @pl.when(k == 0)
    def _():
        acc_ref[...] = jnp.zeros(acc_ref.shape, acc_ref.dtype)

    acc_ref[...] += jnp.dot(x_ref[...], wt_ref[...],
                            preferred_element_type=jnp.float32)

    @pl.when(k == pl.num_programs(2) - 1)
    def _():
        o_ref[...] = (acc_ref[...] + b_ref[...]).astype(o_ref.dtype)


def linear_pallas(x, wt, b, out_dtype):
    """x: [N, D_in], wt: [D_in, D_out] bf16 (pre-transposed), b: [D_out] f32."""
    x = x.astype(wt.dtype)                       # bf16 MXU operands, f32 accumulate
    n, d_in = x.shape
    d_out = wt.shape[1]
    tm = _pick_tile(n, 1024, 8)                  # larger M tile -> fewer weight re-streams
    tn = _pick_tile(d_out, 512, 128)
    tk = _pick_tile(d_in, 512, 128)
    grid = (n // tm, d_out // tn, d_in // tk)
    return pl.pallas_call(
        _linear_kernel,
        out_shape=jax.ShapeDtypeStruct((n, d_out), out_dtype),
        grid_spec=pltpu.PrefetchScalarGridSpec(
            num_scalar_prefetch=0,
            grid=grid,
            in_specs=[
                pl.BlockSpec((tm, tk), lambda i, j, k: (i, k)),
                pl.BlockSpec((tk, tn), lambda i, j, k: (k, j)),
                pl.BlockSpec((1, tn), lambda i, j, k: (0, j)),
            ],
            out_specs=pl.BlockSpec((tm, tn), lambda i, j, k: (i, j)),
            scratch_shapes=[pltpu.VMEM((tm, tn), jnp.float32)],
        ),
        compiler_params=_compiler_params(("parallel", "parallel", "arbitrary")),
    )(x, wt, b.reshape(1, d_out).astype(jnp.float32))


# ---------------------------------------------------------------------------
# Flash-style multi-head attention.
# Blocks: q (1,tq,D), k/v (1,tk,D), bias (1, 1|tq, tk), out (1,tq,D).
# Heads are static lane slices of D (no HBM head transposes anywhere).
# ---------------------------------------------------------------------------
def _mha_kernel(q_ref, k_ref, v_ref, bias_ref, o_ref,
                m_sc, l_sc, acc_sc, *, head_num, d_k):
    ki = pl.program_id(2)

    @pl.when(ki == 0)
    def _():
        m_sc[...] = jnp.full(m_sc.shape, NEG, m_sc.dtype)
        l_sc[...] = jnp.zeros(l_sc.shape, l_sc.dtype)
        acc_sc[...] = jnp.zeros(acc_sc.shape, acc_sc.dtype)

    q = q_ref[0]                       # [tq, D] bf16 (1/sqrt(d_k) folded into Wq)
    k = k_ref[0]                       # [tk, D] bf16
    v = v_ref[0]                       # [tk, D] bf16
    bias = bias_ref[0]                 # [1|tq, tk] f32, 0 (keep) / NEG (masked)

    # Heads unrolled; tq/tk are capped at 256 so per-head score-tile live
    # ranges stay bounded even with many heads.
    for h in range(head_num):
        sl = slice(h * d_k, (h + 1) * d_k)
        hcol = slice(h, h + 1)
        q_h, k_h, v_h = q[:, sl], k[:, sl], v[:, sl]

        # Q @ K^T without materializing a transpose: contract the last dims.
        s = lax.dot_general(q_h, k_h, (((1,), (1,)), ((), ())),
                            preferred_element_type=jnp.float32)     # [tq, tk]
        s = s + bias                                                 # additive mask

        m_prev = m_sc[:, hcol]                                       # [tq, 1]
        m_new = jnp.maximum(m_prev, jnp.max(s, axis=-1, keepdims=True))
        alpha = jnp.exp(m_prev - m_new)
        p = jnp.exp(s - m_new)                                       # [tq, tk] f32
        l_sc[:, hcol] = alpha * l_sc[:, hcol] + jnp.sum(p, axis=-1, keepdims=True)
        acc_sc[:, sl] = alpha * acc_sc[:, sl] + jnp.dot(
            p.astype(v_h.dtype), v_h, preferred_element_type=jnp.float32)
        m_sc[:, hcol] = m_new

    @pl.when(ki == pl.num_programs(2) - 1)
    def _():
        # Exact per-head normalization in place (the approximate EUP reciprocal
        # is not worth its ~1e-3 relative error here), then ONE lane-dense
        # [tq, D] store.
        for h in range(head_num):
            sl = slice(h * d_k, (h + 1) * d_k)
            hcol = slice(h, h + 1)
            # Rows masked at every key position: emit 0 (torch would give NaN).
            inv = jnp.where(m_sc[:, hcol] > 0.5 * NEG, 1.0 / l_sc[:, hcol], 0.0)
            acc_sc[:, sl] = acc_sc[:, sl] * inv
        o_ref[0] = acc_sc[...].astype(o_ref.dtype)


def attention_pallas(q, k, v, bias, *, head_num):
    """q: [B,Sq,D] bf16, k/v: [B,Sk,D] bf16, bias: [1|B, 1|Sq, Sk] f32."""
    b, sq, d = q.shape
    sk = k.shape[1]
    d_k = d // head_num
    mb, mq, _ = bias.shape

    tq = _pick_tile(sq, 256, 8)
    tk = _pick_tile(sk, 256, 128)      # also tiles the bias's last (lane) dim
    grid = (b, sq // tq, sk // tk)     # kv reduction axis last

    # Compact bias: no batch / query broadcast in HBM — handled by index_map.
    bias_blk_q = tq if mq > 1 else 1
    b_of = (lambda bi: bi) if mb > 1 else (lambda bi: 0)
    q_of = (lambda qi: qi) if mq > 1 else (lambda qi: 0)
    bias_spec = pl.BlockSpec((1, bias_blk_q, tk),
                             lambda bi, qi, ki: (b_of(bi), q_of(qi), ki))

    kernel = functools.partial(_mha_kernel, head_num=head_num, d_k=d_k)
    return pl.pallas_call(
        kernel,
        out_shape=jax.ShapeDtypeStruct((b, sq, d), q.dtype),
        grid_spec=pltpu.PrefetchScalarGridSpec(
            num_scalar_prefetch=0,
            grid=grid,
            in_specs=[
                pl.BlockSpec((1, tq, d), lambda bi, qi, ki: (bi, qi, 0)),
                pl.BlockSpec((1, tk, d), lambda bi, qi, ki: (bi, ki, 0)),
                pl.BlockSpec((1, tk, d), lambda bi, qi, ki: (bi, ki, 0)),
                bias_spec,
            ],
            out_specs=pl.BlockSpec((1, tq, d), lambda bi, qi, ki: (bi, qi, 0)),
            scratch_shapes=[
                pltpu.VMEM((tq, head_num), jnp.float32),   # running max   (lane-packed)
                pltpu.VMEM((tq, head_num), jnp.float32),   # running denom (lane-packed)
                pltpu.VMEM((tq, d), jnp.float32),          # running numerator, all heads
            ],
        ),
        compiler_params=_compiler_params(("parallel", "parallel", "arbitrary")),
    )(q, k, v, bias)


# ---------------------------------------------------------------------------
# Mask preparation: torch-style broadcastable mask (True = masked) -> compact
# additive f32 bias [1|B, 1|Sq, Sk] with values 0 / NEG.
# ---------------------------------------------------------------------------
def prepare_bias(mask, batch, sq, sk):
    m = jnp.asarray(mask)
    if m.ndim > 4:
        raise ValueError("mask rank must be <= 4")
    m = m.reshape((1,) * (4 - m.ndim) + m.shape)
    if m.shape[1] != 1:
        # TODO(synk): per-head masks would need a head axis in the kernel's bias block.
        raise NotImplementedError("per-head attention masks are not supported")
    m3 = m[:, 0]  # [B?, Sq?, Sk?]
    if (m3.shape[0] not in (1, batch) or m3.shape[1] not in (1, sq)
            or m3.shape[2] not in (1, sk)):
        raise ValueError(f"mask shape {mask.shape} is not broadcastable")
    if m3.shape[2] != sk:
        m3 = jnp.broadcast_to(m3, m3.shape[:2] + (sk,))
    return m3.astype(jnp.float32) * jnp.float32(NEG)


# ---------------------------------------------------------------------------
# MultiHeadAttention forward (glue in plain JAX, hot paths in Pallas)
# ---------------------------------------------------------------------------
class MultiHeadAttentionPallas:
    def __init__(self, model_dim, head_num, dropout, key):
        assert model_dim % head_num == 0
        self.model_dim = model_dim
        self.head_num = head_num
        self.d_k = model_dim // head_num
        self.dropout = dropout  # nn.Dropout is never applied in forward() -> no-op

        keys = jax.random.split(key, 8)
        bound = 1.0 / math.sqrt(model_dim)

        def init_linear_t(kw, kb):
            # Stored pre-transposed as [D_in, D_out].
            wt = jax.random.uniform(kw, (model_dim, model_dim),
                                    minval=-bound, maxval=bound, dtype=jnp.float32)
            bias = jax.random.uniform(kb, (model_dim,),
                                      minval=-bound, maxval=bound, dtype=jnp.float32)
            return wt, bias

        wq, bq = init_linear_t(keys[0], keys[1])
        wk, bk = init_linear_t(keys[2], keys[3])
        wv, bv = init_linear_t(keys[4], keys[5])
        wo, bo = init_linear_t(keys[6], keys[7])

        # 1/sqrt(d_k) folded into the Q projection (exact; removes a per-kv-step
        # multiply in the kernel). Weights stored bf16 (MXU-native, half the HBM
        # traffic); biases stay f32 and are added to the f32 accumulator.
        d = model_dim
        scale = 1.0 / math.sqrt(self.d_k)
        self.w_qkv_t = jnp.concatenate([wq * scale, wk, wv], axis=1).astype(jnp.bfloat16)
        self.b_qkv = jnp.concatenate([bq * scale, bk, bv]).astype(jnp.float32)
        self.wq_t, self.wk_t, self.wv_t = (self.w_qkv_t[:, :d],
                                           self.w_qkv_t[:, d:2 * d],
                                           self.w_qkv_t[:, 2 * d:])
        self.bq, self.bk, self.bv = (self.b_qkv[:d], self.b_qkv[d:2 * d],
                                     self.b_qkv[2 * d:])
        self.wo_t = wo.astype(jnp.bfloat16)
        self.bo = bo.astype(jnp.float32)

    def __call__(self, query, key, value, mask):
        b, sq, d = query.shape
        sk = key.shape[1]

        if query is key and key is value:
            # Self-attention: fused QKV projection reads the activation once.
            qkv = linear_pallas(query.reshape(b * sq, d), self.w_qkv_t, self.b_qkv,
                                out_dtype=jnp.bfloat16)
            q = qkv[:, :d].reshape(b, sq, d)
            k = qkv[:, d:2 * d].reshape(b, sq, d)
            v = qkv[:, 2 * d:].reshape(b, sq, d)
        else:
            q = linear_pallas(query.reshape(b * sq, d), self.wq_t, self.bq,
                              out_dtype=jnp.bfloat16).reshape(b, sq, d)
            k = linear_pallas(key.reshape(b * sk, d), self.wk_t, self.bk,
                              out_dtype=jnp.bfloat16).reshape(b, sk, d)
            v = linear_pallas(value.reshape(b * sk, d), self.wv_t, self.bv,
                              out_dtype=jnp.bfloat16).reshape(b, sk, d)

        bias = prepare_bias(mask, b, sq, sk)
        attn = attention_pallas(q, k, v, bias, head_num=self.head_num)  # [B,Sq,D] bf16

        out = linear_pallas(attn.reshape(b * sq, d), self.wo_t, self.bo,
                            out_dtype=jnp.float32)
        return out.reshape(b, sq, d)


# ---------------------------------------------------------------------------
# Pure-JAX reference (mirrors the PyTorch forward, using the same bf16 operand
# quantization the kernels consume, f32 accumulation everywhere). Note the
# 1/sqrt(d_k) scale already lives inside wq_t / bq.
# ---------------------------------------------------------------------------
def reference_forward(mha, query, key, value, mask):
    f32, bf16 = jnp.float32, jnp.bfloat16
    b, sq, d = query.shape
    sk = key.shape[1]
    h, dk = mha.head_num, mha.d_k

    def lin(x, wt, bias, out_dtype):
        y = jnp.dot(x.astype(bf16), wt, preferred_element_type=f32) + bias
        return y.astype(out_dtype)

    q = lin(query.reshape(b * sq, d), mha.wq_t, mha.bq, bf16).reshape(b, sq, h, dk).transpose(0, 2, 1, 3)
    k = lin(key.reshape(b * sk, d), mha.wk_t, mha.bk, bf16).reshape(b, sk, h, dk).transpose(0, 2, 1, 3)
    v = lin(value.reshape(b * sk, d), mha.wv_t, mha.bv, bf16).reshape(b, sk, h, dk).transpose(0, 2, 1, 3)

    scores = jnp.einsum('bhqd,bhkd->bhqk', q, k, preferred_element_type=f32)
    m4 = jnp.asarray(mask)
    m4 = m4.reshape((1,) * (4 - m4.ndim) + m4.shape)
    scores = jnp.where(jnp.broadcast_to(m4.astype(bool), scores.shape), -jnp.inf, scores)

    mx = jnp.max(scores, axis=-1, keepdims=True)
    p = jnp.exp(scores - mx)
    l = jnp.sum(p, axis=-1, keepdims=True)
    feat = jnp.einsum('bhqk,bhkd->bhqd', p.astype(bf16), v,
                      preferred_element_type=f32) / l
    cat = feat.transpose(0, 2, 1, 3).reshape(b, sq, h * dk).astype(bf16)
    return jnp.dot(cat, mha.wo_t, preferred_element_type=f32) + mha.bo


if __name__ == "__main__":
    B, S, D, H = 2, 8, 32, 4
    root = jax.random.PRNGKey(0)
    k_param, k_x, k_q, k_k, k_v = jax.random.split(root, 5)

    mha = MultiHeadAttentionPallas(model_dim=D, head_num=H, dropout=0.1, key=k_param)

    # Test 1: self-attention (fused QKV path) with a padding mask [B, 1, 1, Sk]
    # (True = masked, as in torch masked_fill_).
    x = jax.random.normal(k_x, (B, S, D), dtype=jnp.float32)
    pad_mask = jnp.zeros((B, 1, 1, S), dtype=bool).at[1, 0, 0, S - 2:].set(True)
    out = jax.block_until_ready(mha(x, x, x, pad_mask))
    ref = reference_forward(mha, x, x, x, pad_mask)
    assert out.shape == (B, S, D)
    assert jnp.allclose(out, ref, atol=2e-3, rtol=2e-3), "padding-mask mismatch"

    # Test 2: distinct Q/K/V (separate projection path) with a per-query
    # causal mask [1, 1, Sq, Sk].
    query = jax.random.normal(k_q, (B, S, D), dtype=jnp.float32)
    key = jax.random.normal(k_k, (B, S, D), dtype=jnp.float32)
    value = jax.random.normal(k_v, (B, S, D), dtype=jnp.float32)
    causal = jnp.triu(jnp.ones((S, S), dtype=bool), k=1).reshape(1, 1, S, S)
    out2 = jax.block_until_ready(mha(query, key, value, causal))
    ref2 = reference_forward(mha, query, key, value, causal)
    assert jnp.allclose(out2, ref2, atol=2e-3, rtol=2e-3), "causal-mask mismatch"

    print("KERNEL_OK")
</pallas_src>

<mosaic_0001>
module attributes {stable_mosaic.version = 11 : i64} {
  func.func @_linear_kernel(%arg0: i32, %arg1: i32, %arg2: i32, %arg3: memref<16x32xbf16, #tpu.memory_space<vmem>>, %arg4: memref<32x96xbf16, #tpu.memory_space<vmem>>, %arg5: memref<1x96xf32, #tpu.memory_space<vmem>>, %arg6: memref<16x96xbf16, #tpu.memory_space<vmem>>, %arg7: memref<16x96xf32, #tpu.memory_space<vmem>>) attributes {dimension_semantics = [#tpu.dimension_semantics<parallel>, #tpu.dimension_semantics<parallel>, #tpu.dimension_semantics<arbitrary>], iteration_bounds = array<i64: 1, 1, 1>, scalar_prefetch = 0 : i64, scratch_operands = 1 : i64, tpu.core_type = #tpu.core_type<tc>, window_params = [{transform_indices = @transform_0, window_bounds = array<i64: 16, 32>}, {transform_indices = @transform_1, window_bounds = array<i64: 32, 96>}, {transform_indices = @transform_2, window_bounds = array<i64: 1, 96>}, {transform_indices = @transform_3, window_bounds = array<i64: 16, 96>}]} {
    %c0_i32 = arith.constant 0 : i32
    %0 = arith.cmpi eq, %arg2, %c0_i32 : i32
    %1 = arith.extui %0 : i1 to i32
    %c0_i32_0 = arith.constant 0 : i32
    %2 = arith.cmpi ne, %1, %c0_i32_0 : i32
    scf.if %2 {
      %cst_10 = arith.constant 0.000000e+00 : f32
      %12 = vector.broadcast %cst_10 : f32 to vector<16x96xf32>
      %c0_11 = arith.constant 0 : index
      %c0_12 = arith.constant 0 : index
      %13 = vector.load %arg7[%c0_11, %c0_12] : memref<16x96xf32, #tpu.memory_space<vmem>>, vector<16x96xf32>
      tpu.vector_store %arg7[%c0_11, %c0_12], %12 {strides = array<i32>} : memref<16x96xf32, #tpu.memory_space<vmem>>, vector<16x96xf32>,
    } else {
    }
    %c0 = arith.constant 0 : index
    %c0_1 = arith.constant 0 : index
    %3 = vector.load %arg7[%c0, %c0_1] : memref<16x96xf32, #tpu.memory_space<vmem>>, vector<16x96xf32>
    %c0_2 = arith.constant 0 : index
    %c0_3 = arith.constant 0 : index
    %4 = vector.load %arg3[%c0_2, %c0_3] : memref<16x32xbf16, #tpu.memory_space<vmem>>, vector<16x32xbf16>
    %c0_4 = arith.constant 0 : index
    %c0_5 = arith.constant 0 : index
    %5 = vector.load %arg4[%c0_4, %c0_5] : memref<32x96xbf16, #tpu.memory_space<vmem>>, vector<32x96xbf16>
    %cst = arith.constant dense<0.000000e+00> : vector<16x96xf32>
    %6 = tpu.matmul %4, %5, %cst {dimension_numbers = #tpu.dot_dimension_numbers<[1], [0], [0], [1], [0, 0, 1, 1], [], []>} : vector<16x32xbf16>, vector<32x96xbf16>, vector<16x96xf32> -> vector<16x96xf32>
    %7 = arith.addf %3, %6 : vector<16x96xf32>
    %c0_6 = arith.constant 0 : index
    %c0_7 = arith.constant 0 : index
    %8 = vector.load %arg7[%c0_6, %c0_7] : memref<16x96xf32, #tpu.memory_space<vmem>>, vector<16x96xf32>
    tpu.vector_store %arg7[%c0_6, %c0_7], %7 {strides = array<i32>} : memref<16x96xf32, #tpu.memory_space<vmem>>, vector<16x96xf32>,
    %c0_i32_8 = arith.constant 0 : i32
    %9 = arith.cmpi eq, %arg2, %c0_i32_8 : i32
    %10 = arith.extui %9 : i1 to i32
    %c0_i32_9 = arith.constant 0 : i32
    %11 = arith.cmpi ne, %10, %c0_i32_9 : i32
    scf.if %11 {
      %c0_10 = arith.constant 0 : index
      %c0_11 = arith.constant 0 : index
      %12 = vector.load %arg7[%c0_10, %c0_11] : memref<16x96xf32, #tpu.memory_space<vmem>>, vector<16x96xf32>
      %c0_12 = arith.constant 0 : index
      %c0_13 = arith.constant 0 : index
      %13 = vector.load %arg5[%c0_12, %c0_13] : memref<1x96xf32, #tpu.memory_space<vmem>>, vector<1x96xf32>
      %14 = vector.broadcast %13 : vector<1x96xf32> to vector<16x96xf32>
      %15 = arith.addf %12, %14 : vector<16x96xf32>
      %16 = arith.truncf %15 : vector<16x96xf32> to vector<16x96xbf16>
      %c0_14 = arith.constant 0 : index
      %c0_15 = arith.constant 0 : index
      %17 = vector.load %arg6[%c0_14, %c0_15] : memref<16x96xbf16, #tpu.memory_space<vmem>>, vector<16x96xbf16>
      tpu.vector_store %arg6[%c0_14, %c0_15], %16 {strides = array<i32>} : memref<16x96xbf16, #tpu.memory_space<vmem>>, vector<16x96xbf16>,
    } else {
    }
    return
  }
  func.func @transform_0(%arg0: i32, %arg1: i32, %arg2: i32) -> (i32, i32) {
    %c0_i32 = arith.constant 0 : i32
    return %arg0, %arg2 : i32, i32
  }
  func.func @transform_1(%arg0: i32, %arg1: i32, %arg2: i32) -> (i32, i32) {
    %c0_i32 = arith.constant 0 : i32
    return %arg2, %arg1 : i32, i32
  }
  func.func @transform_2(%arg0: i32, %arg1: i32, %arg2: i32) -> (i32, i32) {
    %c0_i32 = arith.constant 0 : i32
    %c0_i32_0 = arith.constant 0 : i32
    return %c0_i32, %arg1 : i32, i32
  }
  func.func @transform_3(%arg0: i32, %arg1: i32, %arg2: i32) -> (i32, i32) {
    %c0_i32 = arith.constant 0 : i32
    return %arg0, %arg1 : i32, i32
  }
}

</mosaic_0001>

<llo_original>
// kernel: tpu_custom_call.1
$region0: #{tpu_custom_call.1}
  #allocation0 [shape = 'u32[]', space=smem, size = 0x4, offset = 0x4, fixed_abs, tag = 'smem constant byte address 0x4 - core index']
  #allocation1 [shape = 'u32[144,128]{1,0:T(1,128)}', space=vmem, size = 0x12000, scoped, tag = 'internal scratch']
  #allocation2 [shape = 'f32[16,96]{1,0:T(8,128)}', space=vmem, size = 0x2000, scoped, tag = 'scratch operand']
  %s0 = inlined_call_operand.hbm [shape: bf16[16,32], index: 0, kind: input, shape index: {}]
  %s1 = inlined_call_operand.hbm [shape: bf16[32,96], index: 1, kind: input, shape index: {}]
  %s2 = inlined_call_operand.vmem [shape: f32[1,96], index: 2, kind: input, shape index: {}]
  %s3 = inlined_call_operand.hbm [shape: bf16[16,96], index: 3, kind: output, shape index: {}]
  %s4 = sld [smem:[#allocation0]]
  $region38: #{tpu_custom_call.1} parent=0
    _
  %s6 = ssub.s32 1, %s4
  %s7 = scalar_select 0, %s6, %s4
  $region1: #{tpu_custom_call.1} parent=0
    #allocation3 [shape = 'u8[4096]{0}', space=vmem, size = 0x1000, scoped, tag = 'input window, operand 0, single buffered']
    #allocation4 [shape = 's32[1]{0}', space=sflag, size = 0x4, scoped, tag = 'scoped memory for tpu_custom_call.1']
    #allocation5 [shape = 's32[1]{0}', space=sflag, size = 0x4, scoped, tag = 'scoped memory for tpu_custom_call.1']
    #allocation6 [shape = 'u8[8192]{0}', space=vmem, size = 0x2000, scoped, tag = 'input window, operand 1, single buffered']
    #allocation7 [shape = 's32[1]{0}', space=sflag, size = 0x4, scoped, tag = 'scoped memory for tpu_custom_call.1']
    #allocation8 [shape = 'u8[4096]{0}', space=vmem, size = 0x1000, scoped, tag = 'output window, operand 0, single buffered']
    %8 = vsyncpa [#allocation4], 0
    %9 = vsyncpa [#allocation7], 0
    %10 = vsyncpa [#allocation5], 0
    // Predicated region
    $region2: #{tpu_custom_call.1} parent=1 // pred_check
      _
    $region3: #{tpu_custom_call.1} parent=1 // pred_check_branch
      %12 = sbr.rel (0) target = $region5
    $region4: #{tpu_custom_call.1} parent=1 // pred_region
      %s14 = ssub.s32 128, 128
      %15 = vsyncadd [#allocation4], %s14
      %s16 = sshll.u32 [#allocation3], 4
      %s17 = int_to_ptr.vmem [resolvable:$true] %s16
      %22 = dma.hbm_to_vmem [thread:$0]  %s0, 128, %s17, [#allocation4], 64, 64, 4
    $region5: #{tpu_custom_call.1} parent=1 // pred_fallthru
      _
    // Predicated region
    $region6: #{tpu_custom_call.1} parent=1 // pred_check
      _
    $region7: #{tpu_custom_call.1} parent=1 // pred_check_branch
      %24 = sbr.rel (0) target = $region9
    $region8: #{tpu_custom_call.1} parent=1 // pred_region
      %s26 = ssub.s32 256, 256
      %27 = vsyncadd [#allocation7], %s26
      %s28 = sshll.u32 [#allocation6], 4
      %s29 = int_to_ptr.vmem [resolvable:$true] %s28
      %34 = dma.hbm_to_vmem [thread:$0]  %s1, 256, %s29, [#allocation7], 64, 64, 4
    $region9: #{tpu_custom_call.1} parent=1 // pred_fallthru
      _
    // Predicated region
    $region10: #{tpu_custom_call.1} parent=1 // pred_check
      _
    $region11: #{tpu_custom_call.1} parent=1 // pred_check_branch
      %36 = sbr.rel (0) target = $region13
    $region12: #{tpu_custom_call.1} parent=1 // pred_region
      _
    $region13: #{tpu_custom_call.1} parent=1 // pred_fallthru
      _
    // Predicated region
    $region14: #{tpu_custom_call.1} parent=1 // pred_check
      _
    $region15: #{tpu_custom_call.1} parent=1 // pred_check_branch
      %38 = sbr.rel (0) target = $region17
    $region16: #{tpu_custom_call.1} parent=1 // pred_region
      %39 = dma.done [#allocation4], 128
    $region17: #{tpu_custom_call.1} parent=1 // pred_fallthru
      _
    // Predicated region
    $region18: #{tpu_custom_call.1} parent=1 // pred_check
      _
    $region19: #{tpu_custom_call.1} parent=1 // pred_check_branch
      %41 = sbr.rel (0) target = $region21
    $region20: #{tpu_custom_call.1} parent=1 // pred_region
      %42 = dma.done [#allocation7], 256
    $region21: #{tpu_custom_call.1} parent=1 // pred_fallthru
      _
    %p44 = scmp.eq.s32.totalorder 0, 0
    // Predicated region
    $region22: #{tpu_custom_call.1} parent=1 // pred_check
      %p45 = pneg %p44
    $region23: #{tpu_custom_call.1} parent=1 // pred_check_branch
      %47 = sbr.rel (%p45) target = $region25
    $region24: #{tpu_custom_call.1} parent=1 // pred_region
      %vm48 = vcmask 785408
      %49 = vst.msk [vmem:[#allocation2] sm:$0xff] %vm48, 0.0
      %50 = vst.msk [vmem:[#allocation2 + $0x8] sm:$0xff] %vm48, 0.0
    $region25: #{tpu_custom_call.1} parent=1 // pred_fallthru
      _
    %v51 = vld [vmem:[#allocation2] sm:$0xff]
    %v52 = vld [vmem:[#allocation2 + $0x8] sm:$0xff]
    %v53 = vld [vmem:[#allocation3] sm:$0xf]
    %v54 = vld [vmem:[#allocation3 + $0x4] sm:$0xf]
    %v55 = vld [vmem:[#allocation6] sm:$0xf]
    %v56 = vld [vmem:[#allocation6 + $0x4] sm:$0xf]
    %v57 = vld [vmem:[#allocation6 + $0x8] sm:$0xf]
    %v58 = vld [vmem:[#allocation6 + $0xc] sm:$0xf]
    %v61 = vunpack.c.l.b16 %v53
    %v62 = vunpack.c.l.b16 %v54
    %v63 = vpack.c.b16 %v62, %v61
    %v68 = vunpack.c.l.b16 %v55
    %v69 = vunpack.c.l.b16 %v56
    %v70 = vunpack.c.l.b16 %v57
    %v71 = vunpack.c.l.b16 %v58
    %v72 = vpack.c.b16 %v69, %v68
    %v73 = vpack.c.b16 %v71, %v70
    %vm76 = vcmask 261120
    %v78 = vsel %vm76, %v63, 0
    %80 = vmatprep.subr.bf16.mxu0 0
    %81 = vmatpush1.bf16.msra.mxu0 %v72
    %82 = vmatprep.subr.bf16.mxu0 0
    %83 = vmatpush1.bf16.msra.mxu0 %v73
    %84 = vmatprep.subr.bf16.mxu0 0
    %85 = vmatpush1.bf16.msra.mxu0 0
    %86 = vmatprep.subr.bf16.mxu0 0
    %87 = vmatpush1.bf16.msra.mxu0 0
    %88 = vmatprep.subr.bf16.mxu0 0
    %89 = vmatpush1.bf16.msra.mxu0 0
    %90 = vmatprep.subr.bf16.mxu0 0
    %91 = vmatpush1.bf16.msra.mxu0 0
    %92 = vmatprep.subr.bf16.mxu0 0
    %93 = vmatpush1.bf16.msra.mxu0 0
    %94 = vmatprep.subr.bf16.mxu0 0
    %95 = vmatpush1.bf16.msra.mxu0 0
    %96 = vmatprep.subr.bf16.mxu0 0
    %97 = vmatpush1.bf16.msra.mxu0 0
    %98 = vmatprep.subr.bf16.mxu0 0
    %99 = vmatpush1.bf16.msra.mxu0 0
    %100 = vmatprep.subr.bf16.mxu0 0
    %101 = vmatpush1.bf16.msra.mxu0 0
    %102 = vmatprep.subr.bf16.mxu0 0
    %103 = vmatpush1.bf16.msra.mxu0 0
    %104 = vmatprep.subr.bf16.mxu0 0
    %105 = vmatpush1.bf16.msra.mxu0 0
    %106 = vmatprep.subr.bf16.mxu0 0
    %107 = vmatpush1.bf16.msra.mxu0 0
    %108 = vmatprep.subr.bf16.mxu0 0
    %109 = vmatpush1.bf16.msra.mxu0 0
    %110 = vmatprep.subr.bf16.mxu0 0
    %111 = vmatpush1.bf16.msra.mxu0 0
    %112 = vmatprep.mubr.bf16.mxu0 0
    %113 = vmatmul.mubr.bf16.gmra.mrb[0].mxu0 %v78
    %v114 = vpop.f32.mrb[0].mxu0
    %v115 = vadd.f32 0.0, %v114
    %v116 = vpop.f32.mrb[0].mxu0
    %v117 = vpop.f32.mrb[0].mxu0
    %v118 = vadd.f32 0.0, %v117
    %v119 = vpop.f32.mrb[0].mxu0
    %120 = vdwg.mxu0
    %v121 = vadd.f32 %v51, %v115
    %v122 = vadd.f32 %v52, %v118
    %vm123 = vcmask 785408
    %124 = vst.msk [vmem:[#allocation2] sm:$0xff] %vm123, %v121
    %125 = vst.msk [vmem:[#allocation2 + $0x8] sm:$0xff] %vm123, %v122
    // Predicated region
    $region26: #{tpu_custom_call.1} parent=1 // pred_check
      %p126 = pneg %p44
    $region27: #{tpu_custom_call.1} parent=1 // pred_check_branch
      %128 = sbr.rel (%p126) target = $region29
    $region28: #{tpu_custom_call.1} parent=1 // pred_region
      %v129 = vld [vmem:[#allocation2] sm:$0xff]
      %v130 = vld [vmem:[#allocation2 + $0x8] sm:$0xff]
      %v131 = vld [vmem:[%s2] sm:$0x1]
      %v133 = vlaneseq
      %v134 = vshrl.u32 %v133, 7
      %v135 = vsub.s32 0, %v134
      %v136 = vrot.slane %v131, %v135
      %v138 = vadd.f32 %v129, %v136
      %v139 = vadd.f32 %v130, %v136
      %v140 = vpack.c.bf16 %v139, %v138
      %v142 = vunpack.c.l.b16 %v140
      %v143 = vunpack.c.h.b16 %v140
      %v144 = vpack.c.b16 %v142, %v142
      %v145 = vpack.c.b16 %v143, %v143
      %vm148 = vcmask 781312
      %149 = vst.msk [vmem:[#allocation8] sm:$0xf] %vm148, %v144
      %150 = vst.msk [vmem:[#allocation8 + $0x4] sm:$0xf] %vm148, %v145
    $region29: #{tpu_custom_call.1} parent=1 // pred_fallthru
      _
    // Predicated region
    $region30: #{tpu_custom_call.1} parent=1 // pred_check
      _
    $region31: #{tpu_custom_call.1} parent=1 // pred_check_branch
      %152 = sbr.rel (0) target = $region33
    $region32: #{tpu_custom_call.1} parent=1 // pred_region
      %s154 = ssub.s32 128, 128
      %155 = vsyncadd [#allocation5], %s154
      %s156 = sshll.u32 [#allocation8], 4
      %s157 = int_to_ptr.vmem [resolvable:$true] %s156
      %162 = dma.vmem_to_hbm [thread:$0]  %s157, 128, %s3, [#allocation5], 64, 64, 4
    $region33: #{tpu_custom_call.1} parent=1 // pred_fallthru
      _
    // Predicated region
    $region34: #{tpu_custom_call.1} parent=1 // pred_check
      _
    $region35: #{tpu_custom_call.1} parent=1 // pred_check_branch
      %164 = sbr.rel (0) target = $region37
    $region36: #{tpu_custom_call.1} parent=1 // pred_region
      %165 = dma.done [#allocation5], 128
    $region37: #{tpu_custom_call.1} parent=1 // pred_fallthru
      _
    %166 = vsyncpa [#allocation4], 1
    %167 = vsyncpa [#allocation7], 1
    %168 = vsyncpa [#allocation5], 1

</llo_original>
